<compile_context>
chip_gen: v7x
topology: tpu7x:2x2x1
jax: 0.10.0
libtpu: 0.0.40
codegen_flags: <defaults>
</compile_context>

<pallas_src>
import functools

import jax
import jax.numpy as jnp
import numpy as np
from jax import lax
from jax.experimental import pallas as pl
from jax.experimental.pallas import tpu as pltpu

ALPHA = 0.2          # LeakyReLU negative slope in GATLayer (reference path only)
NEG_BIG = -9.0e15    # the -9e15 masking constant (reference path only)


# ---------------------------------------------------------------------------
# Fused kernel: GAT (+ReLU) -> GCN (+ReLU) -> Flatten -> Linear+ReLU -> Linear+tanh
# ---------------------------------------------------------------------------
def generator_kernel(adj_ref, noise_ref, par_ref, out_ref, flat_ref, *,
                     B, N, F_gat, F_gcn, H, OUT,
                     W1_OFF, B1_OFF, W2_OFF, B2_OFF, WG_OFF, WGCN_OFF):
    f32 = jnp.float32
    F_in = noise_ref.shape[1]

    adjp = adj_ref[0]          # (B*N, B*N) node-major block-diagonal adjacency
    same = adj_ref[1]          # (B*N, B*N) same-graph indicator (isolated-row fallback)

    # Static slices into the packed parameter slab (views, no copies).
    wg = par_ref[WG_OFF:WG_OFF + F_in, 0:F_gat]          # (F_in, 4)
    wgcn = par_ref[WGCN_OFF:WGCN_OFF + F_gat, 0:F_gcn]   # (4, 8)
    w1 = par_ref[W1_OFF:W1_OFF + N * F_gcn, 0:H]         # (N*8, 16N)
    b1 = par_ref[B1_OFF:B1_OFF + 1, 0:H]                 # (1, 16N)
    w2 = par_ref[W2_OFF:W2_OFF + H, 0:OUT]               # (16N, OUT)
    b2 = par_ref[B2_OFF:B2_OFF + 1, 0:OUT]               # (1, OUT)

    # --- GATLayer --------------------------------------------------------
    h = jnp.dot(noise_ref[...], wg, preferred_element_type=f32)        # (B*N, 4)
    # e[i,j] = leakyrelu([h_i ; h_i] @ a) is constant over j (both repeat variants in the
    # reference produce h_i), so softmax(where(adj>0, e, -9e15)) is exactly uniform over
    # neighbours: 1/deg_i; isolated rows get uniform 1/N over their own graph
    # (exp(-9e15) underflows to 0 in f32) -- exactly as the reference computes.
    mask = (adjp > 0.0).astype(f32)                                     # (B*N, B*N)
    deg = jnp.sum(mask, axis=-1, keepdims=True)                         # (B*N, 1)
    att = jnp.where(deg > 0.0, mask / jnp.maximum(deg, 1.0), same * (1.0 / N))
    # TODO(synk): F.dropout(attention, 0.3) (PyTorch training-mode default) is stochastic;
    # implemented as eval-mode identity (use pltpu.prng_* for training-mode parity).
    h_prime = jnp.dot(att, h, preferred_element_type=f32)               # (B*N, 4)
    # relu(ELU(x)) == relu(x): the ELU is dropped entirely.
    x = jnp.maximum(h_prime, 0.0)

    # --- GCNLayer (+ ReLU) ------------------------------------------------
    temp = jnp.dot(x, wgcn, preferred_element_type=f32)                 # (B*N, 8)
    gcn = jnp.maximum(jnp.dot(adjp, temp, preferred_element_type=f32), 0.0)  # (B*N, 8)

    # --- Flatten(start_dim=1): scatter node-major rows into lane-dense (B, N*8) ---
    # Row n*B+b of `gcn` is (graph b, node n); its 8 features go to lanes n*8..n*8+8.
    for n in range(N):                     # N static & small -> unrolled masked stores
        flat_ref[:, n * F_gcn:(n + 1) * F_gcn] = gcn[n * B:(n + 1) * B, :]

    # --- Linear l1 (+ReLU), Linear l2 (+tanh): one MXU push each ----------
    h1 = jnp.maximum(jnp.dot(flat_ref[...], w1, preferred_element_type=f32) + b1, 0.0)
    out_ref[...] = jnp.tanh(jnp.dot(h1, w2, preferred_element_type=f32) + b2)


# ---------------------------------------------------------------------------
# Wrapper: layout plumbing (node-major block-diag adj, packed parameter slab)
# ---------------------------------------------------------------------------
@jax.jit
def generator_forward(adj, noise, params):
    B, N, F_in = noise.shape
    F_gat = params["wg"].shape[1]        # 4
    F_gcn = params["wgcn"].shape[1]      # 8
    H = params["w1"].shape[1]            # 16 * N
    OUT = params["w2"].shape[1]

    # Node-major stacking: row n*B+b  <->  (graph b, node n).
    noise_nm = jnp.transpose(noise.astype(jnp.float32), (1, 0, 2)).reshape(N * B, F_in)
    eye_b = jnp.eye(B, dtype=jnp.float32)
    # adjp[n*B+b, m*B+b'] = adj[b, n, m] * (b == b')   (block-diag in the node-major basis)
    adjp = jnp.einsum('bnm,bc->nbmc', adj.astype(jnp.float32), eye_b).reshape(N * B, N * B)
    # same[n*B+b, m*B+b'] = (b == b')  -- structural fallback pattern for isolated rows.
    same = jnp.kron(jnp.ones((N, N), jnp.float32), eye_b)
    adj_struct = jnp.stack([adjp, same])                                # one DMA

    # Pack all parameters into a single (rows, lanes) f32 slab (one DMA).
    lanes = max(128, ((max(H, OUT, F_gat, F_gcn, F_in) + 127) // 128) * 128)

    def r8(v):
        return ((v + 7) // 8) * 8

    W1_OFF = 0
    B1_OFF = W1_OFF + r8(N * F_gcn)
    W2_OFF = B1_OFF + 8
    B2_OFF = W2_OFF + r8(H)
    WG_OFF = B2_OFF + 8
    WGCN_OFF = WG_OFF + r8(F_in)
    ROWS = WGCN_OFF + r8(F_gat)

    slab = jnp.zeros((ROWS, lanes), jnp.float32)

    def put(s, a, row):
        a = jnp.asarray(a, jnp.float32)
        return s.at[row:row + a.shape[0], 0:a.shape[1]].set(a)

    slab = put(slab, params["w1"], W1_OFF)
    slab = put(slab, params["b1"], B1_OFF)
    slab = put(slab, params["w2"], W2_OFF)
    slab = put(slab, params["b2"], B2_OFF)
    slab = put(slab, params["wg"], WG_OFF)
    slab = put(slab, params["wgcn"], WGCN_OFF)

    kernel = functools.partial(
        generator_kernel, B=B, N=N, F_gat=F_gat, F_gcn=F_gcn, H=H, OUT=OUT,
        W1_OFF=W1_OFF, B1_OFF=B1_OFF, W2_OFF=W2_OFF, B2_OFF=B2_OFF,
        WG_OFF=WG_OFF, WGCN_OFF=WGCN_OFF)

    vmem = pl.BlockSpec(memory_space=pltpu.MemorySpace.VMEM)
    return pl.pallas_call(
        kernel,
        out_shape=jax.ShapeDtypeStruct((B, OUT), jnp.float32),
        in_specs=[vmem, vmem, vmem],
        out_specs=vmem,
        scratch_shapes=[pltpu.VMEM((B, N * F_gcn), jnp.float32)],
    )(adj_struct, noise_nm, slab)


# ---------------------------------------------------------------------------
# Pure-JAX reference (mirrors the PyTorch forward, incl. the repeat construction)
# ---------------------------------------------------------------------------
def reference_forward(adj, noise, p):
    B, N, _ = noise.shape
    h = noise @ p["wg"]                                              # (B,N,4)
    f_repeat = jnp.tile(h, (1, 1, N)).reshape(B, N * N, -1)
    f_ri = jnp.repeat(h, N, axis=1)
    a_input = jnp.concatenate([f_repeat, f_ri], axis=2)              # (B,N*N,8)
    e = (a_input @ p["ag"])[..., 0]
    e = jnp.where(e > 0, e, ALPHA * e).reshape(B, N, N)
    att = jnp.where(adj > 0, e, NEG_BIG)
    att = jax.nn.softmax(att, axis=2)
    h_prime = att @ h
    gat = jnp.where(h_prime > 0, h_prime, jnp.exp(h_prime) - 1.0)    # ELU
    x = jax.nn.relu(gat)
    x = jax.nn.relu(adj @ (x @ p["wgcn"]))
    x = x.reshape(B, -1)
    x = jax.nn.relu(x @ p["w1"] + p["b1"])
    return jnp.tanh(x @ p["w2"] + p["b2"])


# ---------------------------------------------------------------------------
# Deterministic parameter init (synthetic, mimicking PyTorch init scales)
# ---------------------------------------------------------------------------
def init_params(key, input_size, output_size):
    N = input_size
    ks = jax.random.split(key, 8)

    def xavier(k, shape, gain=1.414):
        bound = gain * np.sqrt(6.0 / (shape[0] + shape[1]))
        return jax.random.uniform(k, shape, jnp.float32, -bound, bound)

    def uni(k, shape, bound):
        return jax.random.uniform(k, shape, jnp.float32, -bound, bound)

    params = {
        "wg": xavier(ks[0], (input_size, 4)),                 # GAT W
        "ag": xavier(ks[1], (8, 1)),                          # GAT a (reference path only)
        "wgcn": uni(ks[2], (4, 8), 1.0 / np.sqrt(8.0)),       # GCN weight
        # Linear layers stored as (in, out); PyTorch-like 1/sqrt(fan_in) scale.
        "w1": uni(ks[3], (8 * N, 16 * N), 1.0 / np.sqrt(8 * N)),
        "b1": uni(ks[4], (1, 16 * N), 1.0 / np.sqrt(8 * N)),
        "w2": uni(ks[5], (16 * N, output_size), 1.0 / np.sqrt(16 * N)),
        "b2": uni(ks[6], (1, output_size), 1.0 / np.sqrt(16 * N)),
    }
    return params


if __name__ == "__main__":
    B = 2
    input_size = 8        # Flatten + Linear(input_size*8, ...) implies N == input_size
    output_size = 16
    N = input_size

    key = jax.random.PRNGKey(0)
    k_adj, k_noise, k_params = jax.random.split(key, 3)

    adj = (jax.random.uniform(k_adj, (B, N, N)) > 0.4).astype(jnp.float32)
    noise = jax.random.normal(k_noise, (B, N, input_size), dtype=jnp.float32)
    params = init_params(k_params, input_size, output_size)

    out = generator_forward(adj, noise, params)
    out = jax.block_until_ready(out)

    ref = reference_forward(adj, noise, params)
    np.testing.assert_allclose(np.asarray(out), np.asarray(ref), rtol=1e-5, atol=1e-5)

    assert out.shape == (B, output_size)
    print("KERNEL_OK")
</pallas_src>

<mosaic_0001>
module attributes {stable_mosaic.version = 11 : i64} {
  func.func @generator_kernel(%arg0: memref<2x16x16xf32, #tpu.memory_space<vmem>>, %arg1: memref<16x8xf32, #tpu.memory_space<vmem>>, %arg2: memref<224x128xf32, #tpu.memory_space<vmem>>, %arg3: memref<2x16xf32, #tpu.memory_space<vmem>>, %arg4: memref<2x64xf32, #tpu.memory_space<vmem>>) attributes {dimension_semantics = [], scalar_prefetch = 0 : i64, scratch_operands = 1 : i64, tpu.core_type = #tpu.core_type<tc>} {
    %c0 = arith.constant 0 : index
    %c0_0 = arith.constant 0 : index
    %c0_1 = arith.constant 0 : index
    %0 = vector.load %arg0[%c0, %c0_0, %c0_1] : memref<2x16x16xf32, #tpu.memory_space<vmem>>, vector<1x16x16xf32>
    %1 = vector.shape_cast %0 : vector<1x16x16xf32> to vector<16x16xf32>
    %c1 = arith.constant 1 : index
    %c0_2 = arith.constant 0 : index
    %c0_3 = arith.constant 0 : index
    %2 = vector.load %arg0[%c1, %c0_2, %c0_3] : memref<2x16x16xf32, #tpu.memory_space<vmem>>, vector<1x16x16xf32>
    %3 = vector.shape_cast %2 : vector<1x16x16xf32> to vector<16x16xf32>
    %c208 = arith.constant 208 : index
    %c0_4 = arith.constant 0 : index
    %4 = vector.load %arg2[%c208, %c0_4] : memref<224x128xf32, #tpu.memory_space<vmem>>, vector<8x4xf32>
    %c216 = arith.constant 216 : index
    %c0_5 = arith.constant 0 : index
    %5 = vector.load %arg2[%c216, %c0_5] : memref<224x128xf32, #tpu.memory_space<vmem>>, vector<4x8xf32>
    %c0_6 = arith.constant 0 : index
    %c0_7 = arith.constant 0 : index
    %6 = vector.load %arg2[%c0_6, %c0_7] : memref<224x128xf32, #tpu.memory_space<vmem>>, vector<64x128xf32>
    %c64 = arith.constant 64 : index
    %c0_8 = arith.constant 0 : index
    %7 = vector.load %arg2[%c64, %c0_8] : memref<224x128xf32, #tpu.memory_space<vmem>>, vector<1x128xf32>
    %c72 = arith.constant 72 : index
    %c0_9 = arith.constant 0 : index
    %8 = vector.load %arg2[%c72, %c0_9] : memref<224x128xf32, #tpu.memory_space<vmem>>, vector<128x16xf32>
    %c200 = arith.constant 200 : index
    %c0_10 = arith.constant 0 : index
    %9 = vector.load %arg2[%c200, %c0_10] : memref<224x128xf32, #tpu.memory_space<vmem>>, vector<1x16xf32>
    %c0_11 = arith.constant 0 : index
    %c0_12 = arith.constant 0 : index
    %10 = vector.load %arg1[%c0_11, %c0_12] : memref<16x8xf32, #tpu.memory_space<vmem>>, vector<16x8xf32>
    %cst = arith.constant dense<0.000000e+00> : vector<16x4xf32>
    %11 = tpu.matmul %10, %4, %cst {dimension_numbers = #tpu.dot_dimension_numbers<[1], [0], [0], [1], [0, 0, 1, 1], [], []>} : vector<16x8xf32>, vector<8x4xf32>, vector<16x4xf32> -> vector<16x4xf32>
    %cst_13 = arith.constant 0.000000e+00 : f32
    %12 = vector.broadcast %cst_13 : f32 to vector<16x16xf32>
    %13 = arith.cmpf ogt, %1, %12 : vector<16x16xf32>
    %14 = arith.extui %13 : vector<16x16xi1> to vector<16x16xi32>
    %15 = arith.sitofp %14 : vector<16x16xi32> to vector<16x16xf32>
    %cst_14 = arith.constant dense<0.000000e+00> : vector<16xf32>
    %16 = vector.multi_reduction <add>, %15, %cst_14 [1] : vector<16x16xf32> to vector<16xf32>
    %17 = vector.shape_cast %16 : vector<16xf32> to vector<16x1xf32>
    %cst_15 = arith.constant 0.000000e+00 : f32
    %18 = vector.broadcast %cst_15 : f32 to vector<16x1xf32>
    %19 = arith.cmpf ogt, %17, %18 : vector<16x1xf32>
    %cst_16 = arith.constant 1.000000e+00 : f32
    %20 = vector.broadcast %cst_16 : f32 to vector<16x1xf32>
    %21 = arith.maximumf %17, %20 : vector<16x1xf32>
    %22 = vector.broadcast %21 : vector<16x1xf32> to vector<16x16xf32>
    %23 = arith.divf %15, %22 : vector<16x16xf32>
    %cst_17 = arith.constant 1.250000e-01 : f32
    %24 = vector.broadcast %cst_17 : f32 to vector<16x16xf32>
    %25 = arith.mulf %3, %24 : vector<16x16xf32>
    %26 = vector.shape_cast %19 : vector<16x1xi1> to vector<16x1xi1>
    %27 = vector.broadcast %26 : vector<16x1xi1> to vector<16x16xi1>
    %28 = arith.select %27, %23, %25 : vector<16x16xi1>, vector<16x16xf32>
    %cst_18 = arith.constant dense<0.000000e+00> : vector<16x4xf32>
    %29 = tpu.matmul %28, %11, %cst_18 {dimension_numbers = #tpu.dot_dimension_numbers<[1], [0], [0], [1], [0, 0, 1, 1], [], []>} : vector<16x16xf32>, vector<16x4xf32>, vector<16x4xf32> -> vector<16x4xf32>
    %cst_19 = arith.constant 0.000000e+00 : f32
    %30 = vector.broadcast %cst_19 : f32 to vector<16x4xf32>
    %31 = arith.maximumf %29, %30 : vector<16x4xf32>
    %cst_20 = arith.constant dense<0.000000e+00> : vector<16x8xf32>
    %32 = tpu.matmul %31, %5, %cst_20 {dimension_numbers = #tpu.dot_dimension_numbers<[1], [0], [0], [1], [0, 0, 1, 1], [], []>} : vector<16x4xf32>, vector<4x8xf32>, vector<16x8xf32> -> vector<16x8xf32>
    %cst_21 = arith.constant dense<0.000000e+00> : vector<16x8xf32>
    %33 = tpu.matmul %1, %32, %cst_21 {dimension_numbers = #tpu.dot_dimension_numbers<[1], [0], [0], [1], [0, 0, 1, 1], [], []>} : vector<16x16xf32>, vector<16x8xf32>, vector<16x8xf32> -> vector<16x8xf32>
    %cst_22 = arith.constant 0.000000e+00 : f32
    %34 = vector.broadcast %cst_22 : f32 to vector<16x8xf32>
    %35 = arith.maximumf %33, %34 : vector<16x8xf32>
    %36 = vector.extract_strided_slice %35 {offsets = [0, 0], sizes = [2, 8], strides = [1, 1]} : vector<16x8xf32> to vector<2x8xf32>
    %c0_23 = arith.constant 0 : index
    %c0_24 = arith.constant 0 : index
    %37 = vector.load %arg4[%c0_23, %c0_24] : memref<2x64xf32, #tpu.memory_space<vmem>>, vector<2x8xf32>
    tpu.vector_store %arg4[%c0_23, %c0_24], %36 {strides = array<i32>} : memref<2x64xf32, #tpu.memory_space<vmem>>, vector<2x8xf32>,
    %38 = vector.extract_strided_slice %35 {offsets = [2, 0], sizes = [2, 8], strides = [1, 1]} : vector<16x8xf32> to vector<2x8xf32>
    %c0_25 = arith.constant 0 : index
    %c8 = arith.constant 8 : index
    %39 = vector.load %arg4[%c0_25, %c8] : memref<2x64xf32, #tpu.memory_space<vmem>>, vector<2x8xf32>
    tpu.vector_store %arg4[%c0_25, %c8], %38 {strides = array<i32>} : memref<2x64xf32, #tpu.memory_space<vmem>>, vector<2x8xf32>,
    %40 = vector.extract_strided_slice %35 {offsets = [4, 0], sizes = [2, 8], strides = [1, 1]} : vector<16x8xf32> to vector<2x8xf32>
    %c0_26 = arith.constant 0 : index
    %c16 = arith.constant 16 : index
    %41 = vector.load %arg4[%c0_26, %c16] : memref<2x64xf32, #tpu.memory_space<vmem>>, vector<2x8xf32>
    tpu.vector_store %arg4[%c0_26, %c16], %40 {strides = array<i32>} : memref<2x64xf32, #tpu.memory_space<vmem>>, vector<2x8xf32>,
    %42 = vector.extract_strided_slice %35 {offsets = [6, 0], sizes = [2, 8], strides = [1, 1]} : vector<16x8xf32> to vector<2x8xf32>
    %c0_27 = arith.constant 0 : index
    %c24 = arith.constant 24 : index
    %43 = vector.load %arg4[%c0_27, %c24] : memref<2x64xf32, #tpu.memory_space<vmem>>, vector<2x8xf32>
    tpu.vector_store %arg4[%c0_27, %c24], %42 {strides = array<i32>} : memref<2x64xf32, #tpu.memory_space<vmem>>, vector<2x8xf32>,
    %44 = vector.extract_strided_slice %35 {offsets = [8, 0], sizes = [2, 8], strides = [1, 1]} : vector<16x8xf32> to vector<2x8xf32>
    %c0_28 = arith.constant 0 : index
    %c32 = arith.constant 32 : index
    %45 = vector.load %arg4[%c0_28, %c32] : memref<2x64xf32, #tpu.memory_space<vmem>>, vector<2x8xf32>
    tpu.vector_store %arg4[%c0_28, %c32], %44 {strides = array<i32>} : memref<2x64xf32, #tpu.memory_space<vmem>>, vector<2x8xf32>,
    %46 = vector.extract_strided_slice %35 {offsets = [10, 0], sizes = [2, 8], strides = [1, 1]} : vector<16x8xf32> to vector<2x8xf32>
    %c0_29 = arith.constant 0 : index
    %c40 = arith.constant 40 : index
    %47 = vector.load %arg4[%c0_29, %c40] : memref<2x64xf32, #tpu.memory_space<vmem>>, vector<2x8xf32>
    tpu.vector_store %arg4[%c0_29, %c40], %46 {strides = array<i32>} : memref<2x64xf32, #tpu.memory_space<vmem>>, vector<2x8xf32>,
    %48 = vector.extract_strided_slice %35 {offsets = [12, 0], sizes = [2, 8], strides = [1, 1]} : vector<16x8xf32> to vector<2x8xf32>
    %c0_30 = arith.constant 0 : index
    %c48 = arith.constant 48 : index
    %49 = vector.load %arg4[%c0_30, %c48] : memref<2x64xf32, #tpu.memory_space<vmem>>, vector<2x8xf32>
    tpu.vector_store %arg4[%c0_30, %c48], %48 {strides = array<i32>} : memref<2x64xf32, #tpu.memory_space<vmem>>, vector<2x8xf32>,
    %50 = vector.extract_strided_slice %35 {offsets = [14, 0], sizes = [2, 8], strides = [1, 1]} : vector<16x8xf32> to vector<2x8xf32>
    %c0_31 = arith.constant 0 : index
    %c56 = arith.constant 56 : index
    %51 = vector.load %arg4[%c0_31, %c56] : memref<2x64xf32, #tpu.memory_space<vmem>>, vector<2x8xf32>
    tpu.vector_store %arg4[%c0_31, %c56], %50 {strides = array<i32>} : memref<2x64xf32, #tpu.memory_space<vmem>>, vector<2x8xf32>,
    %c0_32 = arith.constant 0 : index
    %c0_33 = arith.constant 0 : index
    %52 = vector.load %arg4[%c0_32, %c0_33] : memref<2x64xf32, #tpu.memory_space<vmem>>, vector<2x64xf32>
    %cst_34 = arith.constant dense<0.000000e+00> : vector<2x128xf32>
    %53 = tpu.matmul %52, %6, %cst_34 {dimension_numbers = #tpu.dot_dimension_numbers<[1], [0], [0], [1], [0, 0, 1, 1], [], []>} : vector<2x64xf32>, vector<64x128xf32>, vector<2x128xf32> -> vector<2x128xf32>
    %54 = vector.broadcast %7 : vector<1x128xf32> to vector<2x128xf32>
    %55 = arith.addf %53, %54 : vector<2x128xf32>
    %cst_35 = arith.constant 0.000000e+00 : f32
    %56 = vector.broadcast %cst_35 : f32 to vector<2x128xf32>
    %57 = arith.maximumf %55, %56 : vector<2x128xf32>
    %cst_36 = arith.constant dense<0.000000e+00> : vector<2x16xf32>
    %58 = tpu.matmul %57, %8, %cst_36 {dimension_numbers = #tpu.dot_dimension_numbers<[1], [0], [0], [1], [0, 0, 1, 1], [], []>} : vector<2x128xf32>, vector<128x16xf32>, vector<2x16xf32> -> vector<2x16xf32>
    %59 = vector.broadcast %9 : vector<1x16xf32> to vector<2x16xf32>
    %60 = arith.addf %58, %59 : vector<2x16xf32>
    %61 = math.tanh %60 : vector<2x16xf32>
    %c0_37 = arith.constant 0 : index
    %c0_38 = arith.constant 0 : index
    %62 = vector.load %arg3[%c0_37, %c0_38] : memref<2x16xf32, #tpu.memory_space<vmem>>, vector<2x16xf32>
    tpu.vector_store %arg3[%c0_37, %c0_38], %61 {strides = array<i32>} : memref<2x16xf32, #tpu.memory_space<vmem>>, vector<2x16xf32>,
    return
  }
}

</mosaic_0001>

<llo_original>
// kernel: generator_forward.1
$region0: #{generator_forward.1}
  #allocation0 [shape = 'u32[]', space=smem, size = 0x4, offset = 0x4, fixed_abs, tag = 'smem constant byte address 0x4 - core index']
  #allocation1 [shape = 'u32[144,128]{1,0:T(1,128)}', space=vmem, size = 0x12000, scoped, tag = 'internal scratch']
  #allocation2 [shape = 'f32[2,64]{1,0:T(2,128)}', space=vmem, size = 0x400, scoped, tag = 'scratch operand']
  %s0 = inlined_call_operand.vmem [shape: f32[2,16,16], index: 0, kind: input, shape index: {}]
  %s1 = inlined_call_operand.vmem [shape: f32[16,8], index: 1, kind: input, shape index: {}]
  %s2 = inlined_call_operand.vmem [shape: f32[224,128], index: 2, kind: input, shape index: {}]
  %s3 = inlined_call_operand.hbm [shape: f32[2,16], index: 3, kind: output, shape index: {}]
  %s4 = sld [smem:[#allocation0]]
  $region22: #{generator_forward.1} parent=0
    _
  %s6 = ssub.s32 1, %s4
  %s7 = scalar_select 0, %s6, %s4
  $region1: #{generator_forward.1} parent=0
    #allocation3 [shape = 'u8[1024]{0}', space=vmem, size = 0x400, scoped, tag = 'output window, operand 0, single buffered']
    #allocation4 [shape = 's32[1]{0}', space=sflag, size = 0x4, scoped, tag = 'scoped memory for generator_forward.1']
    %8 = vsyncpa [#allocation4], 0
    // Predicated region
    $region2: #{generator_forward.1} parent=1 // pred_check
      _
    $region3: #{generator_forward.1} parent=1 // pred_check_branch
      %10 = sbr.rel (0) target = $region5
    $region4: #{generator_forward.1} parent=1 // pred_region
      _
    $region5: #{generator_forward.1} parent=1 // pred_fallthru
      _
    // Predicated region
    $region6: #{generator_forward.1} parent=1 // pred_check
      _
    $region7: #{generator_forward.1} parent=1 // pred_check_branch
      %12 = sbr.rel (0) target = $region9
    $region8: #{generator_forward.1} parent=1 // pred_region
      _
    $region9: #{generator_forward.1} parent=1 // pred_fallthru
      _
    // Predicated region
    $region10: #{generator_forward.1} parent=1 // pred_check
      _
    $region11: #{generator_forward.1} parent=1 // pred_check_branch
      %14 = sbr.rel (0) target = $region13
    $region12: #{generator_forward.1} parent=1 // pred_region
      _
    $region13: #{generator_forward.1} parent=1 // pred_fallthru
      _
    %v15 = vld [vmem:[%s0] sm:$0xff]
    %v16 = vld [vmem:[%s0 + $0x8] sm:$0xff]
    %s17 = scalar_lea.vmem %s0, 16
    %v18 = vld [vmem:[%s17] sm:$0xff]
    %v19 = vld [vmem:[%s17 + $0x8] sm:$0xff]
    %v20 = vld [vmem:[%s2 + $0xd0] sm:$0xff]
    %v21 = vld [vmem:[%s2 + $0xd8] sm:$0xf]
    %v22 = vld [vmem:[%s2] sm:$0xff]
    %v23 = vld [vmem:[%s2 + $0x8] sm:$0xff]
    %v24 = vld [vmem:[%s2 + $0x10] sm:$0xff]
    %v25 = vld [vmem:[%s2 + $0x18] sm:$0xff]
    %v26 = vld [vmem:[%s2 + $0x20] sm:$0xff]
    %v27 = vld [vmem:[%s2 + $0x28] sm:$0xff]
    %v28 = vld [vmem:[%s2 + $0x30] sm:$0xff]
    %v29 = vld [vmem:[%s2 + $0x38] sm:$0xff]
    %v30 = vld [vmem:[%s2 + $0x40] sm:$0x1]
    %v31 = vld [vmem:[%s2 + $0x48] sm:$0xff]
    %v32 = vld [vmem:[%s2 + $0x50] sm:$0xff]
    %v33 = vld [vmem:[%s2 + $0x58] sm:$0xff]
    %v34 = vld [vmem:[%s2 + $0x60] sm:$0xff]
    %v35 = vld [vmem:[%s2 + $0x68] sm:$0xff]
    %v36 = vld [vmem:[%s2 + $0x70] sm:$0xff]
    %v37 = vld [vmem:[%s2 + $0x78] sm:$0xff]
    %v38 = vld [vmem:[%s2 + $0x80] sm:$0xff]
    %v39 = vld [vmem:[%s2 + $0x88] sm:$0xff]
    %v40 = vld [vmem:[%s2 + $0x90] sm:$0xff]
    %v41 = vld [vmem:[%s2 + $0x98] sm:$0xff]
    %v42 = vld [vmem:[%s2 + $0xa0] sm:$0xff]
    %v43 = vld [vmem:[%s2 + $0xa8] sm:$0xff]
    %v44 = vld [vmem:[%s2 + $0xb0] sm:$0xff]
    %v45 = vld [vmem:[%s2 + $0xb8] sm:$0xff]
    %v46 = vld [vmem:[%s2 + $0xc0] sm:$0xff]
    %v47 = vld [vmem:[%s2 + $0xc8] sm:$0x1]
    %v48 = vld [vmem:[%s1] sm:$0xff]
    %v49 = vld [vmem:[%s1 + $0x8] sm:$0xff]
    %vm50 = vcmask 64512
    %v52 = vsel %vm50, %v48, 0
    %v55 = vsel %vm50, %v49, 0
    %57 = vmatprep.subr.mxu0 0.0
    %58 = vmatpush1.msra.mxu0 %v20
    %59 = vmatprep.subr.mxu0 0.0
    %60 = vmatpush1.msra.mxu0 0.0
    %61 = vmatprep.subr.mxu0 0.0
    %62 = vmatpush1.msra.mxu0 0.0
    %63 = vmatprep.subr.mxu0 0.0
    %64 = vmatpush1.msra.mxu0 0.0
    %65 = vmatprep.subr.mxu0 0.0
    %66 = vmatpush1.msra.mxu0 0.0
    %67 = vmatprep.subr.mxu0 0.0
    %68 = vmatpush1.msra.mxu0 0.0
    %69 = vmatprep.subr.mxu0 0.0
    %70 = vmatpush1.msra.mxu0 0.0
    %71 = vmatprep.subr.mxu0 0.0
    %72 = vmatpush1.msra.mxu0 0.0
    %73 = vmatprep.subr.mxu0 0.0
    %74 = vmatpush1.msra.mxu0 0.0
    %75 = vmatprep.subr.mxu0 0.0
    %76 = vmatpush1.msra.mxu0 0.0
    %77 = vmatprep.subr.mxu0 0.0
    %78 = vmatpush1.msra.mxu0 0.0
    %79 = vmatprep.subr.mxu0 0.0
    %80 = vmatpush1.msra.mxu0 0.0
    %81 = vmatprep.subr.mxu0 0.0
    %82 = vmatpush1.msra.mxu0 0.0
    %83 = vmatprep.subr.mxu0 0.0
    %84 = vmatpush1.msra.mxu0 0.0
    %85 = vmatprep.subr.mxu0 0.0
    %86 = vmatpush1.msra.mxu0 0.0
    %87 = vmatprep.subr.mxu0 0.0
    %88 = vmatpush1.msra.mxu0 0.0
    %89 = vmatprep.subr.mxu0 0.0
    %90 = vmatpush1.msra.mxu0 0.0
    %91 = vmatprep.subr.mxu0 0.0
    %92 = vmatpush1.msra.mxu0 0.0
    %93 = vmatprep.subr.mxu0 0.0
    %94 = vmatpush1.msra.mxu0 0.0
    %95 = vmatprep.subr.mxu0 0.0
    %96 = vmatpush1.msra.mxu0 0.0
    %97 = vmatprep.subr.mxu0 0.0
    %98 = vmatpush1.msra.mxu0 0.0
    %99 = vmatprep.subr.mxu0 0.0
    %100 = vmatpush1.msra.mxu0 0.0
    %101 = vmatprep.subr.mxu0 0.0
    %102 = vmatpush1.msra.mxu0 0.0
    %103 = vmatprep.subr.mxu0 0.0
    %104 = vmatpush1.msra.mxu0 0.0
    %105 = vmatprep.subr.mxu0 0.0
    %106 = vmatpush1.msra.mxu0 0.0
    %107 = vmatprep.subr.mxu0 0.0
    %108 = vmatpush1.msra.mxu0 0.0
    %109 = vmatprep.subr.mxu0 0.0
    %110 = vmatpush1.msra.mxu0 0.0
    %111 = vmatprep.subr.mxu0 0.0
    %112 = vmatpush1.msra.mxu0 0.0
    %113 = vmatprep.subr.mxu0 0.0
    %114 = vmatpush1.msra.mxu0 0.0
    %115 = vmatprep.subr.mxu0 0.0
    %116 = vmatpush1.msra.mxu0 0.0
    %117 = vmatprep.subr.mxu0 0.0
    %118 = vmatpush1.msra.mxu0 0.0
    %119 = vmatprep.subr.mxu0 0.0
    %120 = vmatpush1.msra.mxu0 0.0
    %121 = vmatprep.mubr.f32.mxu0 0.0
    %122 = vmatmul.mubr.f32.gmra.mrb[0].mxu0 %v52
    %v123 = vpop.f32.mrb[0].mxu0
    %v124 = vadd.f32 0.0, %v123
    %v125 = vpop.f32.mrb[0].mxu0
    %126 = vmatprep.mubr.f32.mxu0 0.0
    %127 = vmatmul.mubr.f32.gmra.mrb[0].mxu0 %v55
    %v128 = vpop.f32.mrb[0].mxu0
    %v129 = vadd.f32 0.0, %v128
    %v130 = vpop.f32.mrb[0].mxu0
    %131 = vdwg.mxu0
    %vm132 = vcmp.gt.f32.partialorder %v15, 0.0
    %vm133 = vcmp.gt.f32.partialorder %v16, 0.0
    %v134 = vsel %vm132, 1, 0
    %v135 = vsel %vm133, 1, 0
    %v136 = vcvt.s32.f32 %v134
    %v137 = vcvt.s32.f32 %v135
    %vm138 = vcmask 130048
    %v139 = vsel %vm138, %v136, 0.0
    %140 = vadd.xlane.f32.xlu0 %v139
    %v141 = vpop.xlane.xlu0 %140
    %v142 = vsel %vm138, %v137, 0.0
    %143 = vadd.xlane.f32.xlu0 %v142
    %v144 = vpop.xlane.xlu0 %143
    %vm145 = vcmp.gt.f32.partialorder %v141, 0.0
    %vm146 = vcmp.gt.f32.partialorder %v144, 0.0
    %v147 = vmax.f32 %v141, 1.0
    %v148 = vmax.f32 %v144, 1.0
    %v149 = vrcp.pop %v147
    %v150 = vmul.f32 %v136, %v149
    %v151 = vrcp.pop %v148
    %v152 = vmul.f32 %v137, %v151
    %v153 = vmul.f32 %v18, 0.125
    %v154 = vmul.f32 %v19, 0.125
    %v155 = vsel %vm145, 1, 0
    %v156 = vsel %vm146, 1, 0
    %vm157 = vcmp.eq.s32.totalorder %v155, 1
    %vm158 = vcmp.eq.s32.totalorder %v156, 1
    %v159 = vsel %vm157, %v150, %v153
    %v160 = vsel %vm158, %v152, %v154
    %v162 = vsel %vm138, %v159, 0
    %v165 = vsel %vm138, %v160, 0
    %167 = vmatprep.subr.mxu0 0.0
    %168 = vmatpush1.msra.mxu0 %v124
    %169 = vmatprep.subr.mxu0 0.0
    %170 = vmatpush1.msra.mxu0 %v129
    %171 = vmatprep.subr.mxu0 0.0
    %172 = vmatpush1.msra.mxu0 0.0
    %173 = vmatprep.subr.mxu0 0.0
    %174 = vmatpush1.msra.mxu0 0.0
    %175 = vmatprep.subr.mxu0 0.0
    %176 = vmatpush1.msra.mxu0 0.0
    %177 = vmatprep.subr.mxu0 0.0
    %178 = vmatpush1.msra.mxu0 0.0
    %179 = vmatprep.subr.mxu0 0.0
    %180 = vmatpush1.msra.mxu0 0.0
    %181 = vmatprep.subr.mxu0 0.0
    %182 = vmatpush1.msra.mxu0 0.0
    %183 = vmatprep.subr.mxu0 0.0
    %184 = vmatpush1.msra.mxu0 0.0
    %185 = vmatprep.subr.mxu0 0.0
    %186 = vmatpush1.msra.mxu0 0.0
    %187 = vmatprep.subr.mxu0 0.0
    %188 = vmatpush1.msra.mxu0 0.0
    %189 = vmatprep.subr.mxu0 0.0
    %190 = vmatpush1.msra.mxu0 0.0
    %191 = vmatprep.subr.mxu0 0.0
    %192 = vmatpush1.msra.mxu0 0.0
    %193 = vmatprep.subr.mxu0 0.0
    %194 = vmatpush1.msra.mxu0 0.0
    %195 = vmatprep.subr.mxu0 0.0
    %196 = vmatpush1.msra.mxu0 0.0
    %197 = vmatprep.subr.mxu0 0.0
    %198 = vmatpush1.msra.mxu0 0.0
    %199 = vmatprep.subr.mxu0 0.0
    %200 = vmatpush1.msra.mxu0 0.0
    %201 = vmatprep.subr.mxu0 0.0
    %202 = vmatpush1.msra.mxu0 0.0
    %203 = vmatprep.subr.mxu0 0.0
    %204 = vmatpush1.msra.mxu0 0.0
    %205 = vmatprep.subr.mxu0 0.0
    %206 = vmatpush1.msra.mxu0 0.0
    %207 = vmatprep.subr.mxu0 0.0
    %208 = vmatpush1.msra.mxu0 0.0
    %209 = vmatprep.subr.mxu0 0.0
    %210 = vmatpush1.msra.mxu0 0.0
    %211 = vmatprep.subr.mxu0 0.0
    %212 = vmatpush1.msra.mxu0 0.0
    %213 = vmatprep.subr.mxu0 0.0
    %214 = vmatpush1.msra.mxu0 0.0
    %215 = vmatprep.subr.mxu0 0.0
    %216 = vmatpush1.msra.mxu0 0.0
    %217 = vmatprep.subr.mxu0 0.0
    %218 = vmatpush1.msra.mxu0 0.0
    %219 = vmatprep.subr.mxu0 0.0
    %220 = vmatpush1.msra.mxu0 0.0
    %221 = vmatprep.subr.mxu0 0.0
    %222 = vmatpush1.msra.mxu0 0.0
    %223 = vmatprep.subr.mxu0 0.0
    %224 = vmatpush1.msra.mxu0 0.0
    %225 = vmatprep.subr.mxu0 0.0
    %226 = vmatpush1.msra.mxu0 0.0
    %227 = vmatprep.subr.mxu0 0.0
    %228 = vmatpush1.msra.mxu0 0.0
    %229 = vmatprep.subr.mxu0 0.0
    %230 = vmatpush1.msra.mxu0 0.0
    %231 = vmatprep.mubr.f32.mxu0 0.0
    %232 = vmatmul.mubr.f32.gmra.mrb[0].mxu0 %v162
    %v233 = vpop.f32.mrb[0].mxu0
    %v234 = vadd.f32 0.0, %v233
    %v235 = vpop.f32.mrb[0].mxu0
    %236 = vmatprep.mubr.f32.mxu0 0.0
    %237 = vmatmul.mubr.f32.gmra.mrb[0].mxu0 %v165
    %v238 = vpop.f32.mrb[0].mxu0
    %v239 = vadd.f32 0.0, %v238
    %v240 = vpop.f32.mrb[0].mxu0
    %241 = vdwg.mxu0
    %v242 = vmax.f32 %v234, 0.0
    %v243 = vmax.f32 %v239, 0.0
    %vm244 = vcmask 31744
    %v246 = vsel %vm244, %v242, 0
    %v249 = vsel %vm244, %v243, 0
    %vm251 = vcmask 1043456
    %v253 = vsel %vm251, %v21, 0
    %255 = vmatprep.subr.mxu0 0.0
    %256 = vmatpush1.msra.mxu0 %v253
    %257 = vmatprep.subr.mxu0 0.0
    %258 = vmatpush1.msra.mxu0 0.0
    %259 = vmatprep.subr.mxu0 0.0
    %260 = vmatpush1.msra.mxu0 0.0
    %261 = vmatprep.subr.mxu0 0.0
    %262 = vmatpush1.msra.mxu0 0.0
    %263 = vmatprep.subr.mxu0 0.0
    %264 = vmatpush1.msra.mxu0 0.0
    %265 = vmatprep.subr.mxu0 0.0
    %266 = vmatpush1.msra.mxu0 0.0
    %267 = vmatprep.subr.mxu0 0.0
    %268 = vmatpush1.msra.mxu0 0.0
    %269 = vmatprep.subr.mxu0 0.0
    %270 = vmatpush1.msra.mxu0 0.0
    %271 = vmatprep.subr.mxu0 0.0
    %272 = vmatpush1.msra.mxu0 0.0
    %273 = vmatprep.subr.mxu0 0.0
    %274 = vmatpush1.msra.mxu0 0.0
    %275 = vmatprep.subr.mxu0 0.0
    %276 = vmatpush1.msra.mxu0 0.0
    %277 = vmatprep.subr.mxu0 0.0
    %278 = vmatpush1.msra.mxu0 0.0
    %279 = vmatprep.subr.mxu0 0.0
    %280 = vmatpush1.msra.mxu0 0.0
    %281 = vmatprep.subr.mxu0 0.0
    %282 = vmatpush1.msra.mxu0 0.0
    %283 = vmatprep.subr.mxu0 0.0
    %284 = vmatpush1.msra.mxu0 0.0
    %285 = vmatprep.subr.mxu0 0.0
    %286 = vmatpush1.msra.mxu0 0.0
    %287 = vmatprep.subr.mxu0 0.0
    %288 = vmatpush1.msra.mxu0 0.0
    %289 = vmatprep.subr.mxu0 0.0
    %290 = vmatpush1.msra.mxu0 0.0
    %291 = vmatprep.subr.mxu0 0.0
    %292 = vmatpush1.msra.mxu0 0.0
    %293 = vmatprep.subr.mxu0 0.0
    %294 = vmatpush1.msra.mxu0 0.0
    %295 = vmatprep.subr.mxu0 0.0
    %296 = vmatpush1.msra.mxu0 0.0
    %297 = vmatprep.subr.mxu0 0.0
    %298 = vmatpush1.msra.mxu0 0.0
    %299 = vmatprep.subr.mxu0 0.0
    %300 = vmatpush1.msra.mxu0 0.0
    %301 = vmatprep.subr.mxu0 0.0
    %302 = vmatpush1.msra.mxu0 0.0
    %303 = vmatprep.subr.mxu0 0.0
    %304 = vmatpush1.msra.mxu0 0.0
    %305 = vmatprep.subr.mxu0 0.0
    %306 = vmatpush1.msra.mxu0 0.0
    %307 = vmatprep.subr.mxu0 0.0
    %308 = vmatpush1.msra.mxu0 0.0
    %309 = vmatprep.subr.mxu0 0.0
    %310 = vmatpush1.msra.mxu0 0.0
    %311 = vmatprep.subr.mxu0 0.0
    %312 = vmatpush1.msra.mxu0 0.0
    %313 = vmatprep.subr.mxu0 0.0
    %314 = vmatpush1.msra.mxu0 0.0
    %315 = vmatprep.subr.mxu0 0.0
    %316 = vmatpush1.msra.mxu0 0.0
    %317 = vmatprep.subr.mxu0 0.0
    %318 = vmatpush1.msra.mxu0 0.0
    %319 = vmatprep.mubr.f32.mxu0 0.0
    %320 = vmatmul.mubr.f32.gmra.mrb[0].mxu0 %v246
    %v321 = vpop.f32.mrb[0].mxu0
    %v322 = vadd.f32 0.0, %v321
    %v323 = vpop.f32.mrb[0].mxu0
    %324 = vmatprep.mubr.f32.mxu0 0.0
    %325 = vmatmul.mubr.f32.gmra.mrb[0].mxu0 %v249
    %v326 = vpop.f32.mrb[0].mxu0
    %v327 = vadd.f32 0.0, %v326
    %v328 = vpop.f32.mrb[0].mxu0
    %329 = vdwg.mxu0
    %v331 = vsel %vm138, %v15, 0
    %v334 = vsel %vm138, %v16, 0
    %336 = vmatprep.subr.mxu0 0.0
    %337 = vmatpush1.msra.mxu0 %v322
    %338 = vmatprep.subr.mxu0 0.0
    %339 = vmatpush1.msra.mxu0 %v327
    %340 = vmatprep.subr.mxu0 0.0
    %341 = vmatpush1.msra.mxu0 0.0
    %342 = vmatprep.subr.mxu0 0.0
    %343 = vmatpush1.msra.mxu0 0.0
    %344 = vmatprep.subr.mxu0 0.0
    %345 = vmatpush1.msra.mxu0 0.0
    %346 = vmatprep.subr.mxu0 0.0
    %347 = vmatpush1.msra.mxu0 0.0
    %348 = vmatprep.subr.mxu0 0.0
    %349 = vmatpush1.msra.mxu0 0.0
    %350 = vmatprep.subr.mxu0 0.0
    %351 = vmatpush1.msra.mxu0 0.0
    %352 = vmatprep.subr.mxu0 0.0
    %353 = vmatpush1.msra.mxu0 0.0
    %354 = vmatprep.subr.mxu0 0.0
    %355 = vmatpush1.msra.mxu0 0.0
    %356 = vmatprep.subr.mxu0 0.0
    %357 = vmatpush1.msra.mxu0 0.0
    %358 = vmatprep.subr.mxu0 0.0
    %359 = vmatpush1.msra.mxu0 0.0
    %360 = vmatprep.subr.mxu0 0.0
    %361 = vmatpush1.msra.mxu0 0.0
    %362 = vmatprep.subr.mxu0 0.0
    %363 = vmatpush1.msra.mxu0 0.0
    %364 = vmatprep.subr.mxu0 0.0
    %365 = vmatpush1.msra.mxu0 0.0
    %366 = vmatprep.subr.mxu0 0.0
    %367 = vmatpush1.msra.mxu0 0.0
    %368 = vmatprep.subr.mxu0 0.0
    %369 = vmatpush1.msra.mxu0 0.0
    %370 = vmatprep.subr.mxu0 0.0
    %371 = vmatpush1.msra.mxu0 0.0
    %372 = vmatprep.subr.mxu0 0.0
    %373 = vmatpush1.msra.mxu0 0.0
    %374 = vmatprep.subr.mxu0 0.0
    %375 = vmatpush1.msra.mxu0 0.0
    %376 = vmatprep.subr.mxu0 0.0
    %377 = vmatpush1.msra.mxu0 0.0
    %378 = vmatprep.subr.mxu0 0.0
    %379 = vmatpush1.msra.mxu0 0.0
    %380 = vmatprep.subr.mxu0 0.0
    %381 = vmatpush1.msra.mxu0 0.0
    %382 = vmatprep.subr.mxu0 0.0
    %383 = vmatpush1.msra.mxu0 0.0
    %384 = vmatprep.subr.mxu0 0.0
    %385 = vmatpush1.msra.mxu0 0.0
    %386 = vmatprep.subr.mxu0 0.0
    %387 = vmatpush1.msra.mxu0 0.0
    %388 = vmatprep.subr.mxu0 0.0
    %389 = vmatpush1.msra.mxu0 0.0
    %390 = vmatprep.subr.mxu0 0.0
    %391 = vmatpush1.msra.mxu0 0.0
    %392 = vmatprep.subr.mxu0 0.0
    %393 = vmatpush1.msra.mxu0 0.0
    %394 = vmatprep.subr.mxu0 0.0
    %395 = vmatpush1.msra.mxu0 0.0
    %396 = vmatprep.subr.mxu0 0.0
    %397 = vmatpush1.msra.mxu0 0.0
    %398 = vmatprep.subr.mxu0 0.0
    %399 = vmatpush1.msra.mxu0 0.0
    %400 = vmatprep.mubr.f32.mxu0 0.0
    %401 = vmatmul.mubr.f32.gmra.mrb[0].mxu0 %v331
    %v402 = vpop.f32.mrb[0].mxu0
    %v403 = vadd.f32 0.0, %v402
    %v404 = vpop.f32.mrb[0].mxu0
    %405 = vmatprep.mubr.f32.mxu0 0.0
    %406 = vmatmul.mubr.f32.gmra.mrb[0].mxu0 %v334
    %v407 = vpop.f32.mrb[0].mxu0
    %v408 = vadd.f32 0.0, %v407
    %v409 = vpop.f32.mrb[0].mxu0
    %410 = vdwg.mxu0
    %v411 = vmax.f32 %v403, 0.0
    %v412 = vmax.f32 %v408, 0.0
    %vm413 = vcmask 58368
    %414 = vst.msk [vmem:[#allocation2] sm:$0x3] %vm413, %v411
    %416 = vrot.lane.b32.xlu0 %v411, 8
    %v417 = vpop.permute.xlu0 %416
    %vm419 = vcmask 126018
    %420 = vst.msk [vmem:[#allocation2 - $0x2] sm:$0xc] %vm419, %v417
    %421 = vrot.lane.b32.xlu0 %v411, 16
    %v422 = vpop.permute.xlu0 %421
    %vm424 = vcmask 193668
    %425 = vst.msk [vmem:[#allocation2 - $0x4] sm:$0x30] %vm424, %v422
    %426 = vrot.lane.b32.xlu0 %v411, 24
    %v427 = vpop.permute.xlu0 %426
    %vm429 = vcmask 261318
    %430 = vst.msk [vmem:[#allocation2 - $0x6] sm:$0xc0] %vm429, %v427
    %432 = vrot.lane.b32.xlu0 %v412, 32
    %v433 = vpop.permute.xlu0 %432
    %vm435 = vcmask 320768
    %436 = vst.msk [vmem:[#allocation2] sm:$0x3] %vm435, %v433
    %437 = vrot.lane.b32.xlu0 %v412, 40
    %v438 = vpop.permute.xlu0 %437
    %vm440 = vcmask 388418
    %441 = vst.msk [vmem:[#allocation2 - $0x2] sm:$0xc] %vm440, %v438
    %442 = vrot.lane.b32.xlu0 %v412, 48
    %v443 = vpop.permute.xlu0 %442
    %vm445 = vcmask 456068
    %446 = vst.msk [vmem:[#allocation2 - $0x4] sm:$0x30] %vm445, %v443
    %447 = vrot.lane.b32.xlu0 %v412, 56
    %v448 = vpop.permute.xlu0 %447
    %vm450 = vcmask 523718
    %451 = vst.msk [vmem:[#allocation2 - $0x6] sm:$0xc0] %vm450, %v448
    %v452 = vld [vmem:[#allocation2] sm:$0x3]
    %v453 = vlaneseq
    %v454 = vshrl.u32 %v453, 7
    %v455 = vsub.s32 0, %v454
    %v456 = vrot.slane %v30, %v455
    %vm457 = vcmask 523264
    %v459 = vsel %vm457, %v452, 0
    %461 = vmatprep.subr.mxu0 0.0
    %462 = vmatpush1.msra.mxu0 %v22
    %463 = vmatprep.subr.mxu0 0.0
    %464 = vmatpush1.msra.mxu0 %v23
    %465 = vmatprep.subr.mxu0 0.0
    %466 = vmatpush1.msra.mxu0 %v24
    %467 = vmatprep.subr.mxu0 0.0
    %468 = vmatpush1.msra.mxu0 %v25
    %469 = vmatprep.subr.mxu0 0.0
    %470 = vmatpush1.msra.mxu0 %v26
    %471 = vmatprep.subr.mxu0 0.0
    %472 = vmatpush1.msra.mxu0 %v27
    %473 = vmatprep.subr.mxu0 0.0
    %474 = vmatpush1.msra.mxu0 %v28
    %475 = vmatprep.subr.mxu0 0.0
    %476 = vmatpush1.msra.mxu0 %v29
    %477 = vmatprep.subr.mxu0 0.0
    %478 = vmatpush1.msra.mxu0 0.0
    %479 = vmatprep.subr.mxu0 0.0
    %480 = vmatpush1.msra.mxu0 0.0
    %481 = vmatprep.subr.mxu0 0.0
    %482 = vmatpush1.msra.mxu0 0.0
    %483 = vmatprep.subr.mxu0 0.0
    %484 = vmatpush1.msra.mxu0 0.0
    %485 = vmatprep.subr.mxu0 0.0
    %486 = vmatpush1.msra.mxu0 0.0
    %487 = vmatprep.subr.mxu0 0.0
    %488 = vmatpush1.msra.mxu0 0.0
    %489 = vmatprep.subr.mxu0 0.0
    %490 = vmatpush1.msra.mxu0 0.0
    %491 = vmatprep.subr.mxu0 0.0
    %492 = vmatpush1.msra.mxu0 0.0
    %493 = vmatprep.subr.mxu0 0.0
    %494 = vmatpush1.msra.mxu0 0.0
    %495 = vmatprep.subr.mxu0 0.0
    %496 = vmatpush1.msra.mxu0 0.0
    %497 = vmatprep.subr.mxu0 0.0
    %498 = vmatpush1.msra.mxu0 0.0
    %499 = vmatprep.subr.mxu0 0.0
    %500 = vmatpush1.msra.mxu0 0.0
    %501 = vmatprep.subr.mxu0 0.0
    %502 = vmatpush1.msra.mxu0 0.0
    %503 = vmatprep.subr.mxu0 0.0
    %504 = vmatpush1.msra.mxu0 0.0
    %505 = vmatprep.subr.mxu0 0.0
    %506 = vmatpush1.msra.mxu0 0.0
    %507 = vmatprep.subr.mxu0 0.0
    %508 = vmatpush1.msra.mxu0 0.0
    %509 = vmatprep.subr.mxu0 0.0
    %510 = vmatpush1.msra.mxu0 0.0
    %511 = vmatprep.subr.mxu0 0.0
    %512 = vmatpush1.msra.mxu0 0.0
    %513 = vmatprep.subr.mxu0 0.0
    %514 = vmatpush1.msra.mxu0 0.0
    %515 = vmatprep.subr.mxu0 0.0
    %516 = vmatpush1.msra.mxu0 0.0
    %517 = vmatprep.subr.mxu0 0.0
    %518 = vmatpush1.msra.mxu0 0.0
    %519 = vmatprep.subr.mxu0 0.0
    %520 = vmatpush1.msra.mxu0 0.0
    %521 = vmatprep.subr.mxu0 0.0
    %522 = vmatpush1.msra.mxu0 0.0
    %523 = vmatprep.subr.mxu0 0.0
    %524 = vmatpush1.msra.mxu0 0.0
    %525 = vmatprep.mubr.f32.mxu0 0.0
    %526 = vmatmul.mubr.f32.gmra.mrb[0].mxu0 %v459
    %v527 = vpop.f32.mrb[0].mxu0
    %v528 = vadd.f32 %v456, %v527
    %v529 = vpop.f32.mrb[0].mxu0
    %530 = vdwg.mxu0
    %v531 = vmax.f32 %v528, 0.0
    %v532 = vlaneseq
    %v533 = vshrl.u32 %v532, 7
    %v534 = vsub.s32 0, %v533
    %v535 = vrot.slane %v47, %v534
    %536 = vmatprep.subr.mxu0 0.0
    %537 = vmatpush1.msra.mxu0 %v31
    %538 = vmatprep.subr.mxu0 0.0
    %539 = vmatpush1.msra.mxu0 %v32
    %540 = vmatprep.subr.mxu0 0.0
    %541 = vmatpush1.msra.mxu0 %v33
    %542 = vmatprep.subr.mxu0 0.0
    %543 = vmatpush1.msra.mxu0 %v34
    %544 = vmatprep.subr.mxu0 0.0
    %545 = vmatpush1.msra.mxu0 %v35
    %546 = vmatprep.subr.mxu0 0.0
    %547 = vmatpush1.msra.mxu0 %v36
    %548 = vmatprep.subr.mxu0 0.0
    %549 = vmatpush1.msra.mxu0 %v37
    %550 = vmatprep.subr.mxu0 0.0
    %551 = vmatpush1.msra.mxu0 %v38
    %552 = vmatprep.subr.mxu0 0.0
    %553 = vmatpush1.msra.mxu0 %v39
    %554 = vmatprep.subr.mxu0 0.0
    %555 = vmatpush1.msra.mxu0 %v40
    %556 = vmatprep.subr.mxu0 0.0
    %557 = vmatpush1.msra.mxu0 %v41
    %558 = vmatprep.subr.mxu0 0.0
    %559 = vmatpush1.msra.mxu0 %v42
    %560 = vmatprep.subr.mxu0 0.0
    %561 = vmatpush1.msra.mxu0 %v43
    %562 = vmatprep.subr.mxu0 0.0
    %563 = vmatpush1.msra.mxu0 %v44
    %564 = vmatprep.subr.mxu0 0.0
    %565 = vmatpush1.msra.mxu0 %v45
    %566 = vmatprep.subr.mxu0 0.0
    %567 = vmatpush1.msra.mxu0 %v46
    %568 = vmatprep.subr.mxu0 0.0
    %569 = vmatpush1.msra.mxu0 0.0
    %570 = vmatprep.subr.mxu0 0.0
    %571 = vmatpush1.msra.mxu0 0.0
    %572 = vmatprep.subr.mxu0 0.0
    %573 = vmatpush1.msra.mxu0 0.0
    %574 = vmatprep.subr.mxu0 0.0
    %575 = vmatpush1.msra.mxu0 0.0
    %576 = vmatprep.subr.mxu0 0.0
    %577 = vmatpush1.msra.mxu0 0.0
    %578 = vmatprep.subr.mxu0 0.0
    %579 = vmatpush1.msra.mxu0 0.0
    %580 = vmatprep.subr.mxu0 0.0
    %581 = vmatpush1.msra.mxu0 0.0
    %582 = vmatprep.subr.mxu0 0.0
    %583 = vmatpush1.msra.mxu0 0.0
    %584 = vmatprep.subr.mxu0 0.0
    %585 = vmatpush1.msra.mxu0 0.0
    %586 = vmatprep.subr.mxu0 0.0
    %587 = vmatpush1.msra.mxu0 0.0
    %588 = vmatprep.subr.mxu0 0.0
    %589 = vmatpush1.msra.mxu0 0.0
    %590 = vmatprep.subr.mxu0 0.0
    %591 = vmatpush1.msra.mxu0 0.0
    %592 = vmatprep.subr.mxu0 0.0
    %593 = vmatpush1.msra.mxu0 0.0
    %594 = vmatprep.subr.mxu0 0.0
    %595 = vmatpush1.msra.mxu0 0.0
    %596 = vmatprep.subr.mxu0 0.0
    %597 = vmatpush1.msra.mxu0 0.0
    %598 = vmatprep.subr.mxu0 0.0
    %599 = vmatpush1.msra.mxu0 0.0
    %600 = vmatprep.mubr.f32.mxu0 0.0
    %601 = vmatmul.mubr.f32.gmra.mrb[0].mxu0 %v531
    %v602 = vpop.f32.mrb[0].mxu0
    %v603 = vadd.f32 %v535, %v602
    %v604 = vpop.f32.mrb[0].mxu0
    %605 = vdwg.mxu0
    %v606 = vtanh.pop %v603
    %vm607 = vcmask 123904
    %608 = vst.msk [vmem:[#allocation3] sm:$0x3] %vm607, %v606
    // Predicated region
    $region14: #{generator_forward.1} parent=1 // pred_check
      _
    $region15: #{generator_forward.1} parent=1 // pred_check_branch
      %610 = sbr.rel (0) target = $region17
    $region16: #{generator_forward.1} parent=1 // pred_region
      %s612 = ssub.s32 32, 32
      %613 = vsyncadd [#allocation4], %s612
      %s615 = sshll.u32 [#allocation3], 4
      %s616 = int_to_ptr.vmem [resolvable:$true] %s615
      %618 = dma.vmem_to_hbm [thread:$0]  %s616, 32, %s3, [#allocation4]
    $region17: #{generator_forward.1} parent=1 // pred_fallthru
      _
    // Predicated region
    $region18: #{generator_forward.1} parent=1 // pred_check
      _
    $region19: #{generator_forward.1} parent=1 // pred_check_branch
      %620 = sbr.rel (0) target = $region21
    $region20: #{generator_forward.1} parent=1 // pred_region
      %621 = dma.done [#allocation4], 32
    $region21: #{generator_forward.1} parent=1 // pred_fallthru
      _
    %622 = vsyncpa [#allocation4], 1

</llo_original>
